<compile_context>
chip_gen: v5e
topology: v5e:2x2
jax: 0.10.0
libtpu: 0.0.40
codegen_flags: <defaults>
</compile_context>

<pallas_src>
import functools

import jax
import jax.numpy as jnp
from jax.experimental import pallas as pl
from jax.experimental.pallas import tpu as pltpu

_LANE = 128
_CHUNK_ROWS = 512                       # in-kernel compute chunk (bounds temporaries)
_PRED_BUF_TARGET = 8 * 1024 * 1024      # aim for <= ~8 MiB of (padded) pred per buffer


def _nll_partial_sum_kernel(pred_ref, tgt_ref, out_ref, acc_ref, *,
                            chunk_rows, num_chunks, rem_rows):
    """Accumulate sum_i pred[i, target[i]] over this partition's row tiles."""
    step = pl.program_id(1)             # reduction ("arbitrary") axis over row tiles

    @pl.when(step == 0)
    def _init():
        acc_ref[...] = jnp.zeros_like(acc_ref)

    c = pred_ref.shape[1]

    def chunk_partial(start, rows, col_iota):
        # One-hot gather of pred[i, target[i]] in the INPUT dtype; rows whose target is the
        # -1 sentinel (trailing-block padding / duplicated ceil-split blocks) match nothing,
        # and jnp.where is a select so pred garbage (even NaN) never propagates.
        p = pred_ref[pl.ds(start, rows), :]
        t = tgt_ref[pl.ds(start, rows), :]
        picked = jnp.where(col_iota == t, p, jnp.zeros((), p.dtype))
        return jnp.sum(picked, axis=0, keepdims=True, dtype=jnp.float32)   # (1, c) f32

    col = jax.lax.broadcasted_iota(jnp.int32, (chunk_rows, c), 1)           # hoisted

    def body(k, acc):
        start = pl.multiple_of(k * chunk_rows, chunk_rows)
        return acc + chunk_partial(start, chunk_rows, col)

    acc = jax.lax.fori_loop(0, num_chunks, body, jnp.zeros((1, c), jnp.float32))

    if rem_rows:                         # static tail when tile_rows % chunk_rows != 0
        col_rem = jax.lax.broadcasted_iota(jnp.int32, (rem_rows, c), 1)
        acc = acc + chunk_partial(num_chunks * chunk_rows, rem_rows, col_rem)

    acc_ref[...] += acc

    @pl.when(step == pl.num_programs(1) - 1)
    def _finalize():
        # Cross-lane reduce once per partition; out_ref block is (1, 1, 1).
        out_ref[0] = jnp.sum(acc_ref[...], axis=-1, keepdims=True)


def _tpu_hw_params():
    """(physical VMEM bytes per core, #TensorCores per chip), with safe fallbacks."""
    try:
        vmem_cap = int(pltpu.get_tpu_info().vmem_capacity_bytes)
    except Exception:
        vmem_cap = 64 * 1024 * 1024      # conservative if the query is unavailable
    # v7x is the only generation with <= 64 MiB VMEM per TensorCore and 2 TCs per chip;
    # v5e/v6e have 128 MiB and a single TensorCore.
    num_tc = 2 if vmem_cap <= 96 * 1024 * 1024 else 1
    return vmem_cap, num_tc


def _choose_tile_rows(n, pred_row_bytes, buffer_budget):
    """Largest row tile whose 2x-buffered pred + target blocks fit the VMEM budget."""
    tgt_row_bytes = _LANE * 4                            # (tile,1) int32 pads to 128 lanes
    per_row = 2 * (pred_row_bytes + tgt_row_bytes)       # double-buffered pred AND target
    rows = max(8, buffer_budget // per_row)
    rows = min(rows, max(8, _PRED_BUF_TARGET // pred_row_bytes))
    if rows >= n:
        return n                                         # single block covering all rows
    if rows >= _CHUNK_ROWS:
        return (rows // _CHUNK_ROWS) * _CHUNK_ROWS       # multiple of the compute chunk
    return max(8, (rows // 8) * 8)                       # sublane-aligned fallback (huge C)


def dloss(pred, target, mat_diff_loss_scale=0.001, *, _tile_rows=None, _num_parts=None):
    """Pallas equivalent of DLoss.forward(pred, target).

    `_tile_rows` / `_num_parts` are test-only overrides of the tiling heuristics.
    Assumes all targets are valid class ids in [0, C) (torch's ignore_index is unused here).
    """
    n, c = pred.shape
    itemsize = jnp.dtype(pred.dtype).itemsize
    c_pad = -(-c // _LANE) * _LANE                       # pred rows pad to 128-lane multiples
    pred_row_bytes = c_pad * itemsize

    vmem_cap, num_tc = _tpu_hw_params()
    vmem_limit = min(int(0.72 * vmem_cap), 96 * 1024 * 1024)        # ~92 MiB v5e/v6e, ~46 MiB v7x
    buffer_budget = max(4 * 1024 * 1024, vmem_limit - 6 * 1024 * 1024)

    tile_rows = _tile_rows if _tile_rows is not None else _choose_tile_rows(
        n, pred_row_bytes, buffer_budget)
    tile_rows = max(1, min(tile_rows, n))
    if tile_rows < n:
        tile_rows = max(8, (tile_rows // 8) * 8)         # multiple of 8 unless it covers all rows
    chunk_rows = min(_CHUNK_ROWS, tile_rows)
    num_chunks, rem_rows = divmod(tile_rows, chunk_rows)

    n_blocks = -(-n // tile_rows)                        # ceil-div
    num_parts = _num_parts if _num_parts is not None else num_tc
    num_parts = num_parts if n_blocks >= num_parts else 1
    steps_per_part = -(-n_blocks // num_parts)           # ceil split (v7x always uses 2 parts)
    total_blocks = num_parts * steps_per_part
    last_block = n_blocks - 1

    # Target as a lane-padded int32 column, padded with the -1 sentinel so that (a) rows past
    # N in the partial trailing block and (b) whole duplicated blocks from the ceil split match
    # no class and contribute exactly 0 to the sum.  Padding the tiny target array is ~free.
    padded_rows = total_blocks * tile_rows
    tgt = jnp.pad(target.astype(jnp.int32).reshape(n, 1),
                  ((0, padded_rows - n), (0, 0)), constant_values=-1)

    kernel = functools.partial(_nll_partial_sum_kernel, chunk_rows=chunk_rows,
                               num_chunks=num_chunks, rem_rows=rem_rows)

    def pred_index(p, i):
        # Clamp duplicated trailing blocks of the ceil split; their targets are all -1.
        return (jnp.minimum(p * steps_per_part + i, last_block), 0)

    def tgt_index(p, i):
        return (p * steps_per_part + i, 0)               # target is padded to every block

    partials = pl.pallas_call(
        kernel,
        out_shape=jax.ShapeDtypeStruct((num_parts, 1, 1), jnp.float32),
        grid_spec=pltpu.PrefetchScalarGridSpec(
            num_scalar_prefetch=0,
            grid=(num_parts, steps_per_part),
            in_specs=[
                pl.BlockSpec((tile_rows, c), pred_index),
                pl.BlockSpec((tile_rows, 1), tgt_index),
            ],
            out_specs=pl.BlockSpec((1, 1, 1), lambda p, i: (p, 0, 0)),
            scratch_shapes=[pltpu.VMEM((1, c), jnp.float32)],
        ),
        compiler_params=pltpu.CompilerParams(
            dimension_semantics=("parallel", "arbitrary"),
            vmem_limit_bytes=vmem_limit),
        cost_estimate=pl.CostEstimate(
            flops=3 * n * c,
            transcendentals=0,
            bytes_accessed=n * c * itemsize + padded_rows * 4 + num_parts * 4),
    )(pred, tgt)

    # nll_loss(mean) = -(1/N) * sum_i pred[i, target[i]]; 1/N is a trace-time constant.
    loss = -jnp.sum(partials) * (1.0 / n)
    mat_diff_loss = 0.0                                  # module hard-codes mat_diff_loss = 0
    return loss + mat_diff_loss * mat_diff_loss_scale


if __name__ == "__main__":
    key = jax.random.PRNGKey(0)
    k1, k2, k3, k4, k5, k6 = jax.random.split(key, 6)

    # Small demo shape consistent with the module: batch=8 rows, 32 classes.
    N, C = 8, 32
    pred = jax.nn.log_softmax(jax.random.normal(k1, (N, C), dtype=jnp.float32), axis=-1)
    target = jax.random.randint(k2, (N,), 0, C, dtype=jnp.int32)
    loss = dloss(pred, target)
    jax.block_until_ready(loss)
    ref = -jnp.mean(pred[jnp.arange(N), target])
    assert jnp.allclose(loss, ref, atol=1e-5, rtol=1e-5), (loss, ref)

    # bf16 path + in-kernel chunk loop with a ragged static tail (single block of 2000 rows).
    N2, C2 = 2000, 40
    pred2 = jax.nn.log_softmax(jax.random.normal(k3, (N2, C2), dtype=jnp.float32),
                               axis=-1).astype(jnp.bfloat16)
    target2 = jax.random.randint(k4, (N2,), 0, C2, dtype=jnp.int32)
    loss2 = dloss(pred2, target2)
    jax.block_until_ready(loss2)
    ref2 = -jnp.mean(pred2.astype(jnp.float32)[jnp.arange(N2), target2])
    assert jnp.allclose(loss2, ref2, atol=1e-4, rtol=1e-4), (loss2, ref2)

    # Forced small tiles: multi-block reduction, 2-partition ceil split with an ODD block
    # count (duplicated trailing block -> clamped pred index + sentinel targets), and a
    # partial last block.  Exercises exactly the always-2-parts v7x path.
    N3, C3 = 1200, 24
    pred3 = jax.nn.log_softmax(jax.random.normal(k5, (N3, C3), dtype=jnp.float32), axis=-1)
    target3 = jax.random.randint(k6, (N3,), 0, C3, dtype=jnp.int32)
    loss3 = dloss(pred3, target3, _tile_rows=512, _num_parts=2)
    jax.block_until_ready(loss3)
    ref3 = -jnp.mean(pred3[jnp.arange(N3), target3])
    assert jnp.allclose(loss3, ref3, atol=1e-5, rtol=1e-5), (loss3, ref3)

    print("KERNEL_OK")
</pallas_src>

<mosaic_0001>
module attributes {stable_mosaic.version = 11 : i64} {
  func.func @_nll_partial_sum_kernel(%arg0: i32, %arg1: i32, %arg2: memref<8x32xf32, #tpu.memory_space<vmem>>, %arg3: memref<8x1xi32, #tpu.memory_space<vmem>>, %arg4: memref<1x1x1xf32, #tpu.memory_space<vmem>>, %arg5: memref<1x32xf32, #tpu.memory_space<vmem>>) attributes {dimension_semantics = [#tpu.dimension_semantics<parallel>, #tpu.dimension_semantics<arbitrary>], iteration_bounds = array<i64: 1, 1>, scalar_prefetch = 0 : i64, scratch_operands = 1 : i64, tpu.core_type = #tpu.core_type<tc>, window_params = [{transform_indices = @transform_0, window_bounds = array<i64: 8, 32>}, {transform_indices = @transform_1, window_bounds = array<i64: 8, 1>}, {transform_indices = @transform_2, window_bounds = array<i64: 1, 1, 1>}]} {
    %c0_i32 = arith.constant 0 : i32
    %0 = arith.cmpi eq, %arg1, %c0_i32 : i32
    %1 = arith.extui %0 : i1 to i32
    %c0_i32_0 = arith.constant 0 : i32
    %2 = arith.cmpi ne, %1, %c0_i32_0 : i32
    scf.if %2 {
      %cst_11 = arith.constant 0.000000e+00 : f32
      %24 = vector.broadcast %cst_11 : f32 to vector<1x32xf32>
      %c0_12 = arith.constant 0 : index
      %c0_13 = arith.constant 0 : index
      %25 = vector.load %arg5[%c0_12, %c0_13] : memref<1x32xf32, #tpu.memory_space<vmem>>, vector<1x32xf32>
      tpu.vector_store %arg5[%c0_12, %c0_13], %24 {strides = array<i32>} : memref<1x32xf32, #tpu.memory_space<vmem>>, vector<1x32xf32>,
    } else {
    }
    %3 = tpu.iota {dimensions = array<i32: 1>} : vector<8x32xi32>
    %cst = arith.constant 0.000000e+00 : f32
    %4 = vector.broadcast %cst : f32 to vector<1x32xf32>
    %c0_i32_1 = arith.constant 0 : i32
    %c8_i32 = arith.constant 8 : i32
    %5 = arith.muli %c0_i32_1, %c8_i32 : i32
    %6 = tpu.assume_multiple %5, 8 : i32
    %7 = arith.index_cast %6 : i32 to index
    %c0 = arith.constant 0 : index
    %8 = vector.load %arg2[%7, %c0] : memref<8x32xf32, #tpu.memory_space<vmem>>, vector<8x32xf32>
    %9 = arith.index_cast %6 : i32 to index
    %c0_2 = arith.constant 0 : index
    %10 = vector.load %arg3[%9, %c0_2] : memref<8x1xi32, #tpu.memory_space<vmem>>, vector<8x1xi32>
    %11 = vector.broadcast %10 : vector<8x1xi32> to vector<8x32xi32>
    %12 = arith.cmpi eq, %3, %11 : vector<8x32xi32>
    %cst_3 = arith.constant 0.000000e+00 : f32
    %13 = vector.broadcast %cst_3 : f32 to vector<8x32xf32>
    %14 = arith.select %12, %8, %13 : vector<8x32xi1>, vector<8x32xf32>
    %cst_4 = arith.constant dense<0.000000e+00> : vector<32xf32>
    %15 = vector.multi_reduction <add>, %14, %cst_4 [0] : vector<8x32xf32> to vector<32xf32>
    %16 = vector.shape_cast %15 : vector<32xf32> to vector<1x32xf32>
    %17 = arith.addf %4, %16 : vector<1x32xf32>
    %c1_i32 = arith.constant 1 : i32
    %c0_5 = arith.constant 0 : index
    %c0_6 = arith.constant 0 : index
    %18 = vector.load %arg5[%c0_5, %c0_6] : memref<1x32xf32, #tpu.memory_space<vmem>>, vector<1x32xf32>
    %19 = arith.addf %18, %17 : vector<1x32xf32>
    %c0_7 = arith.constant 0 : index
    %c0_8 = arith.constant 0 : index
    %20 = vector.load %arg5[%c0_7, %c0_8] : memref<1x32xf32, #tpu.memory_space<vmem>>, vector<1x32xf32>
    tpu.vector_store %arg5[%c0_7, %c0_8], %19 {strides = array<i32>} : memref<1x32xf32, #tpu.memory_space<vmem>>, vector<1x32xf32>,
    %c0_i32_9 = arith.constant 0 : i32
    %21 = arith.cmpi eq, %arg1, %c0_i32_9 : i32
    %22 = arith.extui %21 : i1 to i32
    %c0_i32_10 = arith.constant 0 : i32
    %23 = arith.cmpi ne, %22, %c0_i32_10 : i32
    scf.if %23 {
      %c0_11 = arith.constant 0 : index
      %c0_12 = arith.constant 0 : index
      %24 = vector.load %arg5[%c0_11, %c0_12] : memref<1x32xf32, #tpu.memory_space<vmem>>, vector<1x32xf32>
      %cst_13 = arith.constant dense<0.000000e+00> : vector<1xf32>
      %25 = vector.multi_reduction <add>, %24, %cst_13 [1] : vector<1x32xf32> to vector<1xf32>
      %26 = vector.shape_cast %25 : vector<1xf32> to vector<1x1xf32>
      %c0_14 = arith.constant 0 : index
      %c0_15 = arith.constant 0 : index
      %c0_16 = arith.constant 0 : index
      %27 = vector.load %arg4[%c0_14, %c0_15, %c0_16] : memref<1x1x1xf32, #tpu.memory_space<vmem>>, vector<1x1x1xf32>
      %28 = vector.shape_cast %27 : vector<1x1x1xf32> to vector<1x1xf32>
      %29 = vector.shape_cast %26 : vector<1x1xf32> to vector<1x1x1xf32>
      tpu.vector_store %arg4[%c0_14, %c0_15, %c0_16], %29 {strides = array<i32>} : memref<1x1x1xf32, #tpu.memory_space<vmem>>, vector<1x1x1xf32>,
    } else {
    }
    return
  }
  func.func @transform_0(%arg0: i32, %arg1: i32) -> (i32, i32) {
    %c1_i32 = arith.constant 1 : i32
    %0 = arith.muli %arg0, %c1_i32 : i32
    %1 = arith.addi %0, %arg1 : i32
    %c0_i32 = arith.constant 0 : i32
    %2 = arith.minsi %1, %c0_i32 : i32
    %c0_i32_0 = arith.constant 0 : i32
    %c0_i32_1 = arith.constant 0 : i32
    return %2, %c0_i32_0 : i32, i32
  }
  func.func @transform_1(%arg0: i32, %arg1: i32) -> (i32, i32) {
    %c1_i32 = arith.constant 1 : i32
    %0 = arith.muli %arg0, %c1_i32 : i32
    %1 = arith.addi %0, %arg1 : i32
    %c0_i32 = arith.constant 0 : i32
    %c0_i32_0 = arith.constant 0 : i32
    return %1, %c0_i32 : i32, i32
  }
  func.func @transform_2(%arg0: i32, %arg1: i32) -> (i32, i32, i32) {
    %c0_i32 = arith.constant 0 : i32
    %c0_i32_0 = arith.constant 0 : i32
    %c0_i32_1 = arith.constant 0 : i32
    return %arg0, %c0_i32, %c0_i32_0 : i32, i32, i32
  }
}

</mosaic_0001>

<llo_original>
// kernel: tpu_custom_call.1
$region0: #{tpu_custom_call.1}
  #allocation0 [shape = 'u32[]', space=smem, size = 0x4, offset = 0x4, fixed_abs, tag = 'smem constant byte address 0x4 - core index']
  #allocation1 [shape = 'u32[72,128]{1,0:T(1,128)}', space=vmem, size = 0x9000, scoped, tag = 'internal scratch']
  #allocation2 [shape = 'f32[1,32]{1,0:T(1,128)}', space=vmem, size = 0x200, scoped, tag = 'scratch operand']
  %s0 = inlined_call_operand.vmem [shape: f32[8,32], index: 0, kind: input, shape index: {}]
  %s1 = inlined_call_operand.vmem [shape: s32[8,1], index: 1, kind: input, shape index: {}]
  %s2 = inlined_call_operand.hbm [shape: f32[1,1,1], index: 2, kind: output, shape index: {}]
  %s3 = sld [smem:[#allocation0]]
  $region26: #{tpu_custom_call.1} parent=0
    _
  %s5 = ssub.s32 1, %s3
  %s6 = scalar_select 0, %s5, %s3
  $region1: #{tpu_custom_call.1} parent=0
    #allocation3 [shape = 'u8[512]{0}', space=vmem, size = 0x400, scoped, tag = 'output window, operand 0, single buffered']
    #allocation4 [shape = 's32[1]{0}', space=sflag, size = 0x4, scoped, tag = 'scoped memory for tpu_custom_call.1']
    %7 = vsyncpa [#allocation4], 0
    // Predicated region
    $region2: #{tpu_custom_call.1} parent=1 // pred_check
      _
    $region3: #{tpu_custom_call.1} parent=1 // pred_check_branch
      %9 = sbr.rel (0) target = $region5
    $region4: #{tpu_custom_call.1} parent=1 // pred_region
      %s10 = sadd.s32 0, 0
      %p11 = scmp.lt.s32.totalorder %s10, 0
      %s12 = scalar_select %p11, %s10, 0
      %p13 = scmp.lt.s32.totalorder %s12, 0
      %s14 = scalar_select %p13, %s12, 0
      %s15 = smul.addr %s14, 8
      %s16 = scalar_lea.vmem %s0, %s15
      %s17 = sadd.s32 0, 0
      %p18 = scmp.lt.s32.totalorder %s17, 0
      %s19 = scalar_select %p18, %s17, 0
    $region5: #{tpu_custom_call.1} parent=1 // pred_fallthru
      _
    // Predicated region
    $region6: #{tpu_custom_call.1} parent=1 // pred_check
      _
    $region7: #{tpu_custom_call.1} parent=1 // pred_check_branch
      %21 = sbr.rel (0) target = $region9
    $region8: #{tpu_custom_call.1} parent=1 // pred_region
      %s22 = sadd.s32 0, 0
      %p23 = scmp.lt.s32.totalorder %s22, 0
      %s24 = scalar_select %p23, %s22, 0
      %s25 = smul.addr %s24, 8
      %s26 = scalar_lea.vmem %s1, %s25
      %s27 = sadd.s32 0, 0
    $region9: #{tpu_custom_call.1} parent=1 // pred_fallthru
      _
    %s28 = sadd.s32 0, 0
    %p29 = scmp.lt.s32.totalorder %s28, 0
    %s30 = scalar_select %p29, %s28, 0
    %p31 = scmp.lt.s32.totalorder %s30, 0
    %s32 = scalar_select %p31, %s30, 0
    %s33 = smul.addr %s32, 8
    %s34 = scalar_lea.vmem %s0, %s33
    %s35 = sadd.s32 0, 0
    %p36 = scmp.lt.s32.totalorder %s35, 0
    %s37 = scalar_select %p36, %s35, 0
    %s38 = smul.addr %s37, 8
    %s39 = scalar_lea.vmem %s1, %s38
    %s40 = sadd.s32 0, 0
    %p41 = scmp.lt.s32.totalorder %s40, 0
    %s42 = scalar_select %p41, %s40, 0
    %p43 = scmp.lt.s32.totalorder %s42, 0
    %s44 = scalar_select %p43, %s42, 0
    %s45 = smul.addr %s44, 8
    %s46 = scalar_lea.vmem %s0, %s45
    %s47 = sadd.s32 0, 0
    %p48 = scmp.lt.s32.totalorder %s47, 0
    %s49 = scalar_select %p48, %s47, 0
    %s50 = sadd.s32 0, 0
    %p51 = scmp.lt.s32.totalorder %s50, 0
    %s52 = scalar_select %p51, %s50, 0
    %s53 = smul.addr %s52, 8
    %s54 = scalar_lea.vmem %s1, %s53
    %s55 = sadd.s32 0, 0
    %p56 = scmp.eq.s32.totalorder 0, 0
    // Predicated region
    $region10: #{tpu_custom_call.1} parent=1 // pred_check
      %p57 = pneg %p56
    $region11: #{tpu_custom_call.1} parent=1 // pred_check_branch
      %59 = sbr.rel (%p57) target = $region13
    $region12: #{tpu_custom_call.1} parent=1 // pred_region
      %vm60 = vcmask 253952
      %61 = vst.msk [vmem:[#allocation2] sm:$0x1] %vm60, 0.0
    $region13: #{tpu_custom_call.1} parent=1 // pred_fallthru
      _
    %v62 = vlaneseq
    %v63 = vand.u32 %v62, 127
    %v64 = vld [vmem:[%s46] sm:$0xff]
    %v65 = vld [vmem:[%s54] sm:$0xff]
    %66 = vset.pattern.permute.xlu0 0
    %67 = vperm.xlu0 %66, %v65
    %v68 = vpop.permute.xlu0 %67
    %vm69 = vcmp.eq.s32.totalorder %v63, %v68
    %v70 = vsel %vm69, %v64, 0.0
    %vm71 = vcmask 261120
    %v72 = vsel %vm71, %v70, 0.0
    %v73 = vrot.slane %v72, 4
    %v74 = vadd.f32 %v72, %v73
    %v75 = vrot.slane %v74, 2
    %v76 = vadd.f32 %v74, %v75
    %v77 = vrot.slane %v76, 1
    %v78 = vadd.f32 %v76, %v77
    %v79 = vadd.f32 %v78, 0.0
    %v80 = vld [vmem:[#allocation2] sm:$0x1]
    %v81 = vadd.f32 %v80, %v79
    %vm82 = vcmask 253952
    %83 = vst.msk [vmem:[#allocation2] sm:$0x1] %vm82, %v81
    // Predicated region
    $region14: #{tpu_custom_call.1} parent=1 // pred_check
      %p84 = pneg %p56
    $region15: #{tpu_custom_call.1} parent=1 // pred_check_branch
      %86 = sbr.rel (%p84) target = $region17
    $region16: #{tpu_custom_call.1} parent=1 // pred_region
      %v87 = vld [vmem:[#allocation2] sm:$0x1]
      %v88 = vsel %vm82, %v87, 0.0
      %89 = vadd.xlane.f32.xlu0 %v88
      %v90 = vpop.xlane.xlu0 %89
      %vm91 = vcmask 0
      %92 = vst.msk [vmem:[#allocation3] sm:$0x1] %vm91, %v90
    $region17: #{tpu_custom_call.1} parent=1 // pred_fallthru
      _
    // Predicated region
    $region18: #{tpu_custom_call.1} parent=1 // pred_check
      _
    $region19: #{tpu_custom_call.1} parent=1 // pred_check_branch
      %94 = sbr.rel (0) target = $region21
    $region20: #{tpu_custom_call.1} parent=1 // pred_region
      %96 = vsyncadd [#allocation4], 0
      %s98 = sshll.u32 [#allocation3], 4
      %s99 = int_to_ptr.vmem [resolvable:$true] %s98
      %s100 = sshll.u32 %s2, 4
      %s101 = int_to_ptr.hbm [resolvable:$true] %s100
      %103 = dma.vmem_to_hbm [thread:$0]  %s99, 16, %s101, [#allocation4]
    $region21: #{tpu_custom_call.1} parent=1 // pred_fallthru
      _
    // Predicated region
    $region22: #{tpu_custom_call.1} parent=1 // pred_check
      _
    $region23: #{tpu_custom_call.1} parent=1 // pred_check_branch
      %105 = sbr.rel (0) target = $region25
    $region24: #{tpu_custom_call.1} parent=1 // pred_region
      %107 = dma.done [#allocation4], 16
    $region25: #{tpu_custom_call.1} parent=1 // pred_fallthru
      _
    %108 = vsyncpa [#allocation4], 1

</llo_original>
